<compile_context>
chip_gen: v5e
topology: v5e:2x2
jax: 0.10.0
libtpu: 0.0.40
codegen_flags: <defaults>
</compile_context>

<pallas_src>
import jax
import jax.numpy as jnp
from jax.experimental import pallas as pl
from jax.experimental.pallas import tpu as pltpu


# ----------------------------------------------------------------------------
# Pallas kernels
# ----------------------------------------------------------------------------

def _conv_t_tanh_kernel(p_ref, w_ref, b_ref, o_ref):
    """Per-image transposed conv matmul.

    p_ref: (1, K, M) bf16 patches (M = OH*OW, lane-dense)
    w_ref: (OC, K)  bf16 weights (resident across the grid)
    b_ref: (OC, 1)  f32 bias
    o_ref: (1, OC, M) f32 output -> already NCHW when stacked over the grid.
    """
    acc = jnp.dot(w_ref[...], p_ref[0], preferred_element_type=jnp.float32)
    o_ref[0] = jnp.tanh(acc + b_ref[...])


def _head_kernel(x_ref, w3_ref, b3_ref, w1_ref, b1_ref, w2_ref, b2_ref, o_ref):
    """Fused conv3 (as matmul) -> tanh -> fc1 -> tanh -> fc2 -> log_softmax.

    x_ref: (TM, 400) bf16 flattened pooled activation
    w3_ref: (400, 120) bf16, b3_ref: (1, 120) f32
    w1_ref: (120, 84)  bf16, b1_ref: (1, 84)  f32
    w2_ref: (84, NC)   bf16, b2_ref: (1, NC)  f32
    o_ref:  (TM, NC)   f32 log-probabilities
    """
    h = jnp.tanh(
        jnp.dot(x_ref[...], w3_ref[...], preferred_element_type=jnp.float32)
        + b3_ref[...]
    )
    h = jnp.tanh(
        jnp.dot(h.astype(jnp.bfloat16), w1_ref[...],
                preferred_element_type=jnp.float32)
        + b1_ref[...]
    )
    logits = (
        jnp.dot(h.astype(jnp.bfloat16), w2_ref[...],
                preferred_element_type=jnp.float32)
        + b2_ref[...]
    )
    m = jnp.max(logits, axis=-1, keepdims=True)
    s = logits - m
    lse = jnp.log(jnp.sum(jnp.exp(s), axis=-1, keepdims=True))
    o_ref[...] = (s - lse).astype(o_ref.dtype)


# ----------------------------------------------------------------------------
# Wrappers
# ----------------------------------------------------------------------------

def _im2col_km(x, kh, kw):
    """x: (N, C, H, W) -> patches (N, C*KH*KW, OH*OW).

    K ordering matches PyTorch conv weight (OC, C, KH, KW) flattened over
    (C, KH, KW); layout is already the (K, M) order the transposed matmul
    consumes, so no extra XLA transpose is needed.
    """
    n, c, h, w = x.shape
    oh, ow = h - kh + 1, w - kw + 1
    cols = []
    for i in range(kh):
        for j in range(kw):
            cols.append(x[:, :, i:i + oh, j:j + ow])      # (N, C, OH, OW)
    p = jnp.stack(cols, axis=2)                           # (N, C, KH*KW, OH, OW)
    return p.reshape(n, c * kh * kw, oh * ow), (n, oh, ow)


def conv2d_tanh_nchw(x, weight, bias):
    """tanh(conv2d(x, weight, bias)) (valid padding, stride 1), NCHW in/out."""
    oc, c, kh, kw = weight.shape
    patches, (n, oh, ow) = _im2col_km(x, kh, kw)
    k = c * kh * kw
    m = oh * ow

    p_bf16 = patches.astype(jnp.bfloat16)                 # dominant byte stream
    w_bf16 = weight.reshape(oc, k).astype(jnp.bfloat16)   # (OC, K)
    b_col = bias.reshape(oc, 1).astype(jnp.float32)       # (OC, 1)

    out = pl.pallas_call(
        _conv_t_tanh_kernel,
        out_shape=jax.ShapeDtypeStruct((n, oc, m), jnp.float32),
        grid_spec=pltpu.PrefetchScalarGridSpec(
            num_scalar_prefetch=0,
            grid=(n,),
            in_specs=[
                pl.BlockSpec((1, k, m), lambda i: (i, 0, 0)),   # patches (streamed)
                pl.BlockSpec((oc, k), lambda i: (0, 0)),        # weights (resident)
                pl.BlockSpec((oc, 1), lambda i: (0, 0)),        # bias (resident)
            ],
            out_specs=pl.BlockSpec((1, oc, m), lambda i: (i, 0, 0)),
        ),
        compiler_params=pltpu.CompilerParams(
            dimension_semantics=("parallel",)),
    )(p_bf16, w_bf16, b_col)

    return out.reshape(n, oc, oh, ow)                     # already NCHW, no transpose


def avgpool2x2(x):
    """2x2 average pool, plain XLA (per perf review: cheaper than a kernel)."""
    n, c, h, w = x.shape
    return x.reshape(n, c, h // 2, 2, w // 2, 2).mean(axis=(3, 5))


def fused_head(x_flat, w3, b3, w1, b1, w2, b2):
    """conv3-as-matmul -> tanh -> fc1 -> tanh -> fc2 -> log_softmax.

    x_flat: (N, 400) f32; w3: (400, 120); w1: (120, 84); w2: (84, NC).
    """
    n, k = x_flat.shape
    h1 = w3.shape[1]
    h2 = w1.shape[1]
    nc = w2.shape[1]

    tm = n if n <= 512 else 512                 # batch tile (full if small)
    grid = (pl.cdiv(n, tm),)

    return pl.pallas_call(
        _head_kernel,
        out_shape=jax.ShapeDtypeStruct((n, nc), jnp.float32),
        grid_spec=pltpu.PrefetchScalarGridSpec(
            num_scalar_prefetch=0,
            grid=grid,
            in_specs=[
                pl.BlockSpec((tm, k), lambda i: (i, 0)),     # activations (streamed)
                pl.BlockSpec((k, h1), lambda i: (0, 0)),     # conv3 weight (resident)
                pl.BlockSpec((1, h1), lambda i: (0, 0)),
                pl.BlockSpec((h1, h2), lambda i: (0, 0)),    # fc1 weight
                pl.BlockSpec((1, h2), lambda i: (0, 0)),
                pl.BlockSpec((h2, nc), lambda i: (0, 0)),    # fc2 weight
                pl.BlockSpec((1, nc), lambda i: (0, 0)),
            ],
            out_specs=pl.BlockSpec((tm, nc), lambda i: (i, 0)),
        ),
        compiler_params=pltpu.CompilerParams(
            dimension_semantics=("parallel",)),
    )(x_flat.astype(jnp.bfloat16),
      w3.astype(jnp.bfloat16), b3.reshape(1, -1).astype(jnp.float32),
      w1.astype(jnp.bfloat16), b1.reshape(1, -1).astype(jnp.float32),
      w2.astype(jnp.bfloat16), b2.reshape(1, -1).astype(jnp.float32))


# ----------------------------------------------------------------------------
# LeNet5 forward
# ----------------------------------------------------------------------------

def init_lenet5_params(key, n_classes=10):
    """Deterministic parameter init (uniform +/- 1/sqrt(fan_in), PyTorch-like)."""
    def uinit(k, shape, fan_in):
        bound = 1.0 / jnp.sqrt(jnp.float32(fan_in))
        return jax.random.uniform(k, shape, jnp.float32, -bound, bound)

    ks = jax.random.split(key, 10)
    return {
        "conv1_w": uinit(ks[0], (6, 1, 5, 5), 1 * 5 * 5),
        "conv1_b": uinit(ks[1], (6,), 1 * 5 * 5),
        "conv2_w": uinit(ks[2], (16, 6, 5, 5), 6 * 5 * 5),
        "conv2_b": uinit(ks[3], (16,), 6 * 5 * 5),
        "conv3_w": uinit(ks[4], (120, 16, 5, 5), 16 * 5 * 5),
        "conv3_b": uinit(ks[5], (120,), 16 * 5 * 5),
        "fc1_w": uinit(ks[6], (120, 84), 120),   # stored as (in, out)
        "fc1_b": uinit(ks[7], (84,), 120),
        "fc2_w": uinit(ks[8], (84, n_classes), 84),
        "fc2_b": uinit(ks[9], (n_classes,), 84),
    }


def lenet5_forward(params, x):
    """x: (N, 1, 32, 32) float32 (NCHW) -> log-probs (N, n_classes)."""
    h = conv2d_tanh_nchw(x, params["conv1_w"], params["conv1_b"])   # (N, 6, 28, 28)
    h = avgpool2x2(h)                                               # (N, 6, 14, 14)
    h = conv2d_tanh_nchw(h, params["conv2_w"], params["conv2_b"])   # (N, 16, 10, 10)
    h = avgpool2x2(h)                                               # (N, 16, 5, 5)
    flat = h.reshape(h.shape[0], -1)                                # (N, 400)
    # conv3 (OH=OW=1) folded into the head: weight (120,16,5,5) -> (400,120)
    w3 = params["conv3_w"].reshape(120, 16 * 5 * 5).T
    return fused_head(flat, w3, params["conv3_b"],
                      params["fc1_w"], params["fc1_b"],
                      params["fc2_w"], params["fc2_b"])


# Pure-JAX reference (f32 everywhere) for a sanity check.
def _ref_forward(params, x):
    def conv(h, w, b):
        y = jax.lax.conv_general_dilated(
            h, w, window_strides=(1, 1), padding="VALID",
            dimension_numbers=("NCHW", "OIHW", "NCHW"))
        return jnp.tanh(y + b.reshape(1, -1, 1, 1))

    h = conv(x, params["conv1_w"], params["conv1_b"])
    h = avgpool2x2(h)
    h = conv(h, params["conv2_w"], params["conv2_b"])
    h = avgpool2x2(h)
    h = conv(h, params["conv3_w"], params["conv3_b"])
    flat = h.reshape(h.shape[0], -1)
    h1 = jnp.tanh(flat @ params["fc1_w"] + params["fc1_b"])
    logits = h1 @ params["fc2_w"] + params["fc2_b"]
    return jax.nn.log_softmax(logits, axis=1)


if __name__ == "__main__":
    key = jax.random.PRNGKey(0)
    k_param, k_input = jax.random.split(key)

    params = init_lenet5_params(k_param, n_classes=10)
    # LeNet5 conv arithmetic (32 -> 28 -> 14 -> 10 -> 5 -> 1) requires 1x32x32.
    x = jax.random.normal(k_input, (2, 1, 32, 32), dtype=jnp.float32)

    fwd = jax.jit(lenet5_forward)
    log_probs = jax.block_until_ready(fwd(params, x))

    assert log_probs.shape == (2, 10), log_probs.shape
    # log_softmax rows must exponentiate-sum to ~1
    row_sums = jnp.exp(log_probs).sum(axis=1)
    assert jnp.allclose(row_sums, 1.0, atol=1e-4), row_sums
    # loose tolerance: Pallas path uses bf16 matmul operands with f32 accumulation
    ref = _ref_forward(params, x)
    assert jnp.max(jnp.abs(log_probs - ref)) < 1e-1, (log_probs, ref)

    print("KERNEL_OK")
</pallas_src>

<mosaic_0001>
module attributes {stable_mosaic.version = 11 : i64} {
  func.func @_conv_t_tanh_kernel(%arg0: i32, %arg1: memref<1x25x784xbf16, #tpu.memory_space<vmem>>, %arg2: memref<6x25xbf16, #tpu.memory_space<vmem>>, %arg3: memref<6x1xf32, #tpu.memory_space<vmem>>, %arg4: memref<1x6x784xf32, #tpu.memory_space<vmem>>) attributes {dimension_semantics = [#tpu.dimension_semantics<parallel>], iteration_bounds = array<i64: 2>, scalar_prefetch = 0 : i64, scratch_operands = 0 : i64, tpu.core_type = #tpu.core_type<tc>, window_params = [{transform_indices = @transform_0, window_bounds = array<i64: 1, 25, 784>}, {pipeline_mode = #tpu.pipeline_mode<synchronous>, transform_indices = @transform_1, window_bounds = array<i64: 6, 25>}, {pipeline_mode = #tpu.pipeline_mode<synchronous>, transform_indices = @transform_2, window_bounds = array<i64: 6, 1>}, {transform_indices = @transform_3, window_bounds = array<i64: 1, 6, 784>}]} {
    %c0 = arith.constant 0 : index
    %c0_0 = arith.constant 0 : index
    %0 = vector.load %arg2[%c0, %c0_0] : memref<6x25xbf16, #tpu.memory_space<vmem>>, vector<6x25xbf16>
    %c0_1 = arith.constant 0 : index
    %c0_2 = arith.constant 0 : index
    %c0_3 = arith.constant 0 : index
    %1 = vector.load %arg1[%c0_1, %c0_2, %c0_3] : memref<1x25x784xbf16, #tpu.memory_space<vmem>>, vector<1x25x784xbf16>
    %2 = vector.shape_cast %1 : vector<1x25x784xbf16> to vector<25x784xbf16>
    %cst = arith.constant dense<0.000000e+00> : vector<6x784xf32>
    %3 = tpu.matmul %0, %2, %cst {dimension_numbers = #tpu.dot_dimension_numbers<[1], [0], [0], [1], [0, 0, 1, 1], [], []>} : vector<6x25xbf16>, vector<25x784xbf16>, vector<6x784xf32> -> vector<6x784xf32>
    %c0_4 = arith.constant 0 : index
    %c0_5 = arith.constant 0 : index
    %4 = vector.load %arg3[%c0_4, %c0_5] : memref<6x1xf32, #tpu.memory_space<vmem>>, vector<6x1xf32>
    %5 = vector.broadcast %4 : vector<6x1xf32> to vector<6x784xf32>
    %6 = arith.addf %3, %5 : vector<6x784xf32>
    %7 = math.tanh %6 : vector<6x784xf32>
    %c0_6 = arith.constant 0 : index
    %c0_7 = arith.constant 0 : index
    %c0_8 = arith.constant 0 : index
    %8 = vector.load %arg4[%c0_6, %c0_7, %c0_8] : memref<1x6x784xf32, #tpu.memory_space<vmem>>, vector<1x6x784xf32>
    %9 = vector.shape_cast %8 : vector<1x6x784xf32> to vector<6x784xf32>
    %10 = vector.shape_cast %7 : vector<6x784xf32> to vector<1x6x784xf32>
    tpu.vector_store %arg4[%c0_6, %c0_7, %c0_8], %10 {strides = array<i32>} : memref<1x6x784xf32, #tpu.memory_space<vmem>>, vector<1x6x784xf32>,
    return
  }
  func.func @transform_0(%arg0: i32) -> (i32, i32, i32) {
    %c0_i32 = arith.constant 0 : i32
    %c0_i32_0 = arith.constant 0 : i32
    %c0_i32_1 = arith.constant 0 : i32
    return %arg0, %c0_i32, %c0_i32_0 : i32, i32, i32
  }
  func.func @transform_1(%arg0: i32) -> (i32, i32) {
    %c0_i32 = arith.constant 0 : i32
    %c0_i32_0 = arith.constant 0 : i32
    %c0_i32_1 = arith.constant 0 : i32
    return %c0_i32, %c0_i32_0 : i32, i32
  }
  func.func @transform_2(%arg0: i32) -> (i32, i32) {
    %c0_i32 = arith.constant 0 : i32
    %c0_i32_0 = arith.constant 0 : i32
    %c0_i32_1 = arith.constant 0 : i32
    return %c0_i32, %c0_i32_0 : i32, i32
  }
  func.func @transform_3(%arg0: i32) -> (i32, i32, i32) {
    %c0_i32 = arith.constant 0 : i32
    %c0_i32_0 = arith.constant 0 : i32
    %c0_i32_1 = arith.constant 0 : i32
    return %arg0, %c0_i32, %c0_i32_0 : i32, i32, i32
  }
}

module attributes {stable_mosaic.version = 11 : i64} {
  func.func @_conv_t_tanh_kernel(%arg0: i32, %arg1: memref<1x150x100xbf16, #tpu.memory_space<vmem>>, %arg2: memref<16x150xbf16, #tpu.memory_space<vmem>>, %arg3: memref<16x1xf32, #tpu.memory_space<vmem>>, %arg4: memref<1x16x100xf32, #tpu.memory_space<vmem>>) attributes {dimension_semantics = [#tpu.dimension_semantics<parallel>], iteration_bounds = array<i64: 2>, scalar_prefetch = 0 : i64, scratch_operands = 0 : i64, tpu.core_type = #tpu.core_type<tc>, window_params = [{transform_indices = @transform_0, window_bounds = array<i64: 1, 150, 100>}, {pipeline_mode = #tpu.pipeline_mode<synchronous>, transform_indices = @transform_1, window_bounds = array<i64: 16, 150>}, {pipeline_mode = #tpu.pipeline_mode<synchronous>, transform_indices = @transform_2, window_bounds = array<i64: 16, 1>}, {transform_indices = @transform_3, window_bounds = array<i64: 1, 16, 100>}]} {
    %c0 = arith.constant 0 : index
    %c0_0 = arith.constant 0 : index
    %0 = vector.load %arg2[%c0, %c0_0] : memref<16x150xbf16, #tpu.memory_space<vmem>>, vector<16x150xbf16>
    %c0_1 = arith.constant 0 : index
    %c0_2 = arith.constant 0 : index
    %c0_3 = arith.constant 0 : index
    %1 = vector.load %arg1[%c0_1, %c0_2, %c0_3] : memref<1x150x100xbf16, #tpu.memory_space<vmem>>, vector<1x150x100xbf16>
    %2 = vector.shape_cast %1 : vector<1x150x100xbf16> to vector<150x100xbf16>
    %cst = arith.constant dense<0.000000e+00> : vector<16x100xf32>
    %3 = tpu.matmul %0, %2, %cst {dimension_numbers = #tpu.dot_dimension_numbers<[1], [0], [0], [1], [0, 0, 1, 1], [], []>} : vector<16x150xbf16>, vector<150x100xbf16>, vector<16x100xf32> -> vector<16x100xf32>
    %c0_4 = arith.constant 0 : index
    %c0_5 = arith.constant 0 : index
    %4 = vector.load %arg3[%c0_4, %c0_5] : memref<16x1xf32, #tpu.memory_space<vmem>>, vector<16x1xf32>
    %5 = vector.broadcast %4 : vector<16x1xf32> to vector<16x100xf32>
    %6 = arith.addf %3, %5 : vector<16x100xf32>
    %7 = math.tanh %6 : vector<16x100xf32>
    %c0_6 = arith.constant 0 : index
    %c0_7 = arith.constant 0 : index
    %c0_8 = arith.constant 0 : index
    %8 = vector.load %arg4[%c0_6, %c0_7, %c0_8] : memref<1x16x100xf32, #tpu.memory_space<vmem>>, vector<1x16x100xf32>
    %9 = vector.shape_cast %8 : vector<1x16x100xf32> to vector<16x100xf32>
    %10 = vector.shape_cast %7 : vector<16x100xf32> to vector<1x16x100xf32>
    tpu.vector_store %arg4[%c0_6, %c0_7, %c0_8], %10 {strides = array<i32>} : memref<1x16x100xf32, #tpu.memory_space<vmem>>, vector<1x16x100xf32>,
    return
  }
  func.func @transform_0(%arg0: i32) -> (i32, i32, i32) {
    %c0_i32 = arith.constant 0 : i32
    %c0_i32_0 = arith.constant 0 : i32
    %c0_i32_1 = arith.constant 0 : i32
    return %arg0, %c0_i32, %c0_i32_0 : i32, i32, i32
  }
  func.func @transform_1(%arg0: i32) -> (i32, i32) {
    %c0_i32 = arith.constant 0 : i32
    %c0_i32_0 = arith.constant 0 : i32
    %c0_i32_1 = arith.constant 0 : i32
    return %c0_i32, %c0_i32_0 : i32, i32
  }
  func.func @transform_2(%arg0: i32) -> (i32, i32) {
    %c0_i32 = arith.constant 0 : i32
    %c0_i32_0 = arith.constant 0 : i32
    %c0_i32_1 = arith.constant 0 : i32
    return %c0_i32, %c0_i32_0 : i32, i32
  }
  func.func @transform_3(%arg0: i32) -> (i32, i32, i32) {
    %c0_i32 = arith.constant 0 : i32
    %c0_i32_0 = arith.constant 0 : i32
    %c0_i32_1 = arith.constant 0 : i32
    return %arg0, %c0_i32, %c0_i32_0 : i32, i32, i32
  }
}

module attributes {stable_mosaic.version = 11 : i64} {
  func.func @_head_kernel(%arg0: i32, %arg1: memref<2x400xbf16, #tpu.memory_space<vmem>>, %arg2: memref<400x120xbf16, #tpu.memory_space<vmem>>, %arg3: memref<1x120xf32, #tpu.memory_space<vmem>>, %arg4: memref<120x84xbf16, #tpu.memory_space<vmem>>, %arg5: memref<1x84xf32, #tpu.memory_space<vmem>>, %arg6: memref<84x10xbf16, #tpu.memory_space<vmem>>, %arg7: memref<1x10xf32, #tpu.memory_space<vmem>>, %arg8: memref<2x10xf32, #tpu.memory_space<vmem>>) attributes {dimension_semantics = [#tpu.dimension_semantics<parallel>], iteration_bounds = array<i64: 1>, scalar_prefetch = 0 : i64, scratch_operands = 0 : i64, tpu.core_type = #tpu.core_type<tc>, window_params = [{transform_indices = @transform_0, window_bounds = array<i64: 2, 400>}, {pipeline_mode = #tpu.pipeline_mode<synchronous>, transform_indices = @transform_1, window_bounds = array<i64: 400, 120>}, {pipeline_mode = #tpu.pipeline_mode<synchronous>, transform_indices = @transform_2, window_bounds = array<i64: 1, 120>}, {pipeline_mode = #tpu.pipeline_mode<synchronous>, transform_indices = @transform_3, window_bounds = array<i64: 120, 84>}, {pipeline_mode = #tpu.pipeline_mode<synchronous>, transform_indices = @transform_4, window_bounds = array<i64: 1, 84>}, {pipeline_mode = #tpu.pipeline_mode<synchronous>, transform_indices = @transform_5, window_bounds = array<i64: 84, 10>}, {pipeline_mode = #tpu.pipeline_mode<synchronous>, transform_indices = @transform_6, window_bounds = array<i64: 1, 10>}, {transform_indices = @transform_7, window_bounds = array<i64: 2, 10>}]} {
    %c0 = arith.constant 0 : index
    %c0_0 = arith.constant 0 : index
    %0 = vector.load %arg1[%c0, %c0_0] : memref<2x400xbf16, #tpu.memory_space<vmem>>, vector<2x400xbf16>
    %c0_1 = arith.constant 0 : index
    %c0_2 = arith.constant 0 : index
    %1 = vector.load %arg2[%c0_1, %c0_2] : memref<400x120xbf16, #tpu.memory_space<vmem>>, vector<400x120xbf16>
    %cst = arith.constant dense<0.000000e+00> : vector<2x120xf32>
    %2 = tpu.matmul %0, %1, %cst {dimension_numbers = #tpu.dot_dimension_numbers<[1], [0], [0], [1], [0, 0, 1, 1], [], []>} : vector<2x400xbf16>, vector<400x120xbf16>, vector<2x120xf32> -> vector<2x120xf32>
    %c0_3 = arith.constant 0 : index
    %c0_4 = arith.constant 0 : index
    %3 = vector.load %arg3[%c0_3, %c0_4] : memref<1x120xf32, #tpu.memory_space<vmem>>, vector<1x120xf32>
    %4 = vector.broadcast %3 : vector<1x120xf32> to vector<2x120xf32>
    %5 = arith.addf %2, %4 : vector<2x120xf32>
    %6 = math.tanh %5 : vector<2x120xf32>
    %7 = arith.truncf %6 : vector<2x120xf32> to vector<2x120xbf16>
    %c0_5 = arith.constant 0 : index
    %c0_6 = arith.constant 0 : index
    %8 = vector.load %arg4[%c0_5, %c0_6] : memref<120x84xbf16, #tpu.memory_space<vmem>>, vector<120x84xbf16>
    %cst_7 = arith.constant dense<0.000000e+00> : vector<2x84xf32>
    %9 = tpu.matmul %7, %8, %cst_7 {dimension_numbers = #tpu.dot_dimension_numbers<[1], [0], [0], [1], [0, 0, 1, 1], [], []>} : vector<2x120xbf16>, vector<120x84xbf16>, vector<2x84xf32> -> vector<2x84xf32>
    %c0_8 = arith.constant 0 : index
    %c0_9 = arith.constant 0 : index
    %10 = vector.load %arg5[%c0_8, %c0_9] : memref<1x84xf32, #tpu.memory_space<vmem>>, vector<1x84xf32>
    %11 = vector.broadcast %10 : vector<1x84xf32> to vector<2x84xf32>
    %12 = arith.addf %9, %11 : vector<2x84xf32>
    %13 = math.tanh %12 : vector<2x84xf32>
    %14 = arith.truncf %13 : vector<2x84xf32> to vector<2x84xbf16>
    %c0_10 = arith.constant 0 : index
    %c0_11 = arith.constant 0 : index
    %15 = vector.load %arg6[%c0_10, %c0_11] : memref<84x10xbf16, #tpu.memory_space<vmem>>, vector<84x10xbf16>
    %cst_12 = arith.constant dense<0.000000e+00> : vector<2x10xf32>
    %16 = tpu.matmul %14, %15, %cst_12 {dimension_numbers = #tpu.dot_dimension_numbers<[1], [0], [0], [1], [0, 0, 1, 1], [], []>} : vector<2x84xbf16>, vector<84x10xbf16>, vector<2x10xf32> -> vector<2x10xf32>
    %c0_13 = arith.constant 0 : index
    %c0_14 = arith.constant 0 : index
    %17 = vector.load %arg7[%c0_13, %c0_14] : memref<1x10xf32, #tpu.memory_space<vmem>>, vector<1x10xf32>
    %18 = vector.broadcast %17 : vector<1x10xf32> to vector<2x10xf32>
    %19 = arith.addf %16, %18 : vector<2x10xf32>
    %cst_15 = arith.constant dense<0xFF800000> : vector<2xf32>
    %20 = vector.multi_reduction <maximumf>, %19, %cst_15 [1] : vector<2x10xf32> to vector<2xf32>
    %21 = vector.shape_cast %20 : vector<2xf32> to vector<2x1xf32>
    %22 = vector.broadcast %21 : vector<2x1xf32> to vector<2x10xf32>
    %23 = arith.subf %19, %22 : vector<2x10xf32>
    %24 = math.exp %23 : vector<2x10xf32>
    %cst_16 = arith.constant dense<0.000000e+00> : vector<2xf32>
    %25 = vector.multi_reduction <add>, %24, %cst_16 [1] : vector<2x10xf32> to vector<2xf32>
    %26 = vector.shape_cast %25 : vector<2xf32> to vector<2x1xf32>
    %27 = math.log %26 : vector<2x1xf32>
    %28 = vector.broadcast %27 : vector<2x1xf32> to vector<2x10xf32>
    %29 = arith.subf %23, %28 : vector<2x10xf32>
    %c0_17 = arith.constant 0 : index
    %c0_18 = arith.constant 0 : index
    %30 = vector.load %arg8[%c0_17, %c0_18] : memref<2x10xf32, #tpu.memory_space<vmem>>, vector<2x10xf32>
    tpu.vector_store %arg8[%c0_17, %c0_18], %29 {strides = array<i32>} : memref<2x10xf32, #tpu.memory_space<vmem>>, vector<2x10xf32>,
    return
  }
  func.func @transform_0(%arg0: i32) -> (i32, i32) {
    %c0_i32 = arith.constant 0 : i32
    %c0_i32_0 = arith.constant 0 : i32
    return %arg0, %c0_i32 : i32, i32
  }
  func.func @transform_1(%arg0: i32) -> (i32, i32) {
    %c0_i32 = arith.constant 0 : i32
    %c0_i32_0 = arith.constant 0 : i32
    %c0_i32_1 = arith.constant 0 : i32
    return %c0_i32, %c0_i32_0 : i32, i32
  }
  func.func @transform_2(%arg0: i32) -> (i32, i32) {
    %c0_i32 = arith.constant 0 : i32
    %c0_i32_0 = arith.constant 0 : i32
    %c0_i32_1 = arith.constant 0 : i32
    return %c0_i32, %c0_i32_0 : i32, i32
  }
  func.func @transform_3(%arg0: i32) -> (i32, i32) {
    %c0_i32 = arith.constant 0 : i32
    %c0_i32_0 = arith.constant 0 : i32
    %c0_i32_1 = arith.constant 0 : i32
    return %c0_i32, %c0_i32_0 : i32, i32
  }
  func.func @transform_4(%arg0: i32) -> (i32, i32) {
    %c0_i32 = arith.constant 0 : i32
    %c0_i32_0 = arith.constant 0 : i32
    %c0_i32_1 = arith.constant 0 : i32
    return %c0_i32, %c0_i32_0 : i32, i32
  }
  func.func @transform_5(%arg0: i32) -> (i32, i32) {
    %c0_i32 = arith.constant 0 : i32
    %c0_i32_0 = arith.constant 0 : i32
    %c0_i32_1 = arith.constant 0 : i32
    return %c0_i32, %c0_i32_0 : i32, i32
  }
  func.func @transform_6(%arg0: i32) -> (i32, i32) {
    %c0_i32 = arith.constant 0 : i32
    %c0_i32_0 = arith.constant 0 : i32
    %c0_i32_1 = arith.constant 0 : i32
    return %c0_i32, %c0_i32_0 : i32, i32
  }
  func.func @transform_7(%arg0: i32) -> (i32, i32) {
    %c0_i32 = arith.constant 0 : i32
    %c0_i32_0 = arith.constant 0 : i32
    return %arg0, %c0_i32 : i32, i32
  }
}

</mosaic_0001>

<llo_original>
// kernel: lenet5_forward.3
$region0: #{lenet5_forward.3}
  #allocation0 [shape = 'u32[]', space=smem, size = 0x4, offset = 0x4, fixed_abs, tag = 'smem constant byte address 0x4 - core index']
  #allocation1 [shape = 'u32[72,128]{1,0:T(1,128)}', space=vmem, size = 0x9000, scoped, tag = 'internal scratch']
  %s0 = inlined_call_operand.vmem [shape: bf16[2,25,784], index: 0, kind: input, shape index: {}]
  %s1 = inlined_call_operand.vmem [shape: bf16[6,25], index: 1, kind: input, shape index: {}]
  %s2 = inlined_call_operand.vmem [shape: f32[6,1], index: 2, kind: input, shape index: {}]
  %s3 = inlined_call_operand.vmem [shape: f32[2,6,784], index: 3, kind: output, shape index: {}]
  %s4 = sld [smem:[#allocation0]]
  $region45: #{lenet5_forward.3} parent=0
    _
  %s6 = ssub.s32 1, %s4
  %s7 = scalar_select 0, %s6, %s4
  loop: start=0, step=1, limit=4
  $region2: #{lenet5_forward.3} parent=0 // loop_pre_header
    _
  $region3: #{lenet5_forward.3} parent=0 // loop_header
    %s9 = sphi 0, %s13
    %p10 = scmp.ge.s32.totalorder %s9, 4
    %s19 = sphi 0, %s21
    %s22 = sphi 0, %s19
    %s23 = sphi 0, %s22
    %s39 = sphi 0, %s23
    %s43 = sphi 0, %s43
    %s45 = sphi 0, %s43
    %s46 = sphi 0, %s45
    %s60 = sphi 0, %s46
    %s64 = sphi 0, %s64
    %s66 = sphi 0, %s64
    %s67 = sphi 0, %s66
    %s81 = sphi 0, %s67
    %s87 = sphi 0, %s89
    %s90 = sphi 0, %s87
    %s91 = sphi 0, %s90
    %s107 = sphi 0, %s91
  $region4: #{lenet5_forward.3} parent=0 // loop_header_branch
    %12 = sbr.rel (%p10) target = $region8
  $region5: #{lenet5_forward.3} parent=0 // loop_body
    %s14 = ssub.s32 %s9, 1
    %s15 = ssub.s32 %s9, 2
    %s16 = sadd.s32 %s9, 1
    %s17 = ssub.s32 %s9, %s16
    %p18 = scmp.eq.s32.totalorder %s17, 0
    %s20 = sadd.s32 %s19, 1
    %s21 = scalar_select %p18, %s19, %s20
    %p24 = pneg %p18
    %p25 = scmp.eq.s32.totalorder %s9, 1
    %p26 = por %p24, %p25
    %p27 = scmp.ne.s32.totalorder %s19, %s22
    %p28 = scmp.eq.s32.totalorder %s9, 0
    %p29 = por %p27, %p28
    %p30 = scmp.ne.s32.totalorder %s19, %s22
    %p31 = scmp.eq.s32.totalorder %s14, 1
    %p32 = por %p30, %p31
    %p33 = scmp.ne.s32.totalorder %s22, %s23
    %p34 = scmp.eq.s32.totalorder %s14, 0
    %p35 = por %p33, %p34
    %p36 = scmp.ne.s32.totalorder %s22, %s23
    %p37 = scmp.eq.s32.totalorder %s15, 1
    %p38 = por %p36, %p37
    %p40 = scmp.ne.s32.totalorder %s23, %s39
    %p41 = scmp.eq.s32.totalorder %s15, 0
    %p42 = por %p40, %p41
    %s44 = sadd.s32 %s43, 1
    %p47 = scmp.eq.s32.totalorder %s9, 1
    %p48 = scmp.ne.s32.totalorder %s43, %s45
    %p49 = scmp.eq.s32.totalorder %s9, 0
    %p50 = por %p48, %p49
    %p51 = scmp.ne.s32.totalorder %s43, %s45
    %p52 = scmp.eq.s32.totalorder %s14, 1
    %p53 = por %p51, %p52
    %p54 = scmp.ne.s32.totalorder %s45, %s46
    %p55 = scmp.eq.s32.totalorder %s14, 0
    %p56 = por %p54, %p55
    %p57 = scmp.ne.s32.totalorder %s45, %s46
    %p58 = scmp.eq.s32.totalorder %s15, 1
    %p59 = por %p57, %p58
    %p61 = scmp.ne.s32.totalorder %s46, %s60
    %p62 = scmp.eq.s32.totalorder %s15, 0
    %p63 = por %p61, %p62
    %s65 = sadd.s32 %s64, 1
    %p68 = scmp.eq.s32.totalorder %s9, 1
    %p69 = scmp.ne.s32.totalorder %s64, %s66
    %p70 = scmp.eq.s32.totalorder %s9, 0
    %p71 = por %p69, %p70
    %p72 = scmp.ne.s32.totalorder %s64, %s66
    %p73 = scmp.eq.s32.totalorder %s14, 1
    %p74 = por %p72, %p73
    %p75 = scmp.ne.s32.totalorder %s66, %s67
    %p76 = scmp.eq.s32.totalorder %s14, 0
    %p77 = por %p75, %p76
    %p78 = scmp.ne.s32.totalorder %s66, %s67
    %p79 = scmp.eq.s32.totalorder %s15, 1
    %p80 = por %p78, %p79
    %p82 = scmp.ne.s32.totalorder %s67, %s81
    %p83 = scmp.eq.s32.totalorder %s15, 0
    %p84 = por %p82, %p83
    %s85 = ssub.s32 %s9, %s16
    %p86 = scmp.eq.s32.totalorder %s85, 0
    %s88 = sadd.s32 %s87, 1
    %s89 = scalar_select %p86, %s87, %s88
    %p92 = pneg %p86
    %p93 = scmp.eq.s32.totalorder %s9, 1
    %p94 = por %p92, %p93
    %p95 = scmp.ne.s32.totalorder %s87, %s90
    %p96 = scmp.eq.s32.totalorder %s9, 0
    %p97 = por %p95, %p96
    %p98 = scmp.ne.s32.totalorder %s87, %s90
    %p99 = scmp.eq.s32.totalorder %s14, 1
    %p100 = por %p98, %p99
    %p101 = scmp.ne.s32.totalorder %s90, %s91
    %p102 = scmp.eq.s32.totalorder %s14, 0
    %p103 = por %p101, %p102
    %p104 = scmp.ne.s32.totalorder %s90, %s91
    %p105 = scmp.eq.s32.totalorder %s15, 1
    %p106 = por %p104, %p105
    %p108 = scmp.ne.s32.totalorder %s91, %s107
    %p109 = scmp.eq.s32.totalorder %s15, 0
    %p110 = por %p108, %p109
    %p111 = scmp.le.s32.totalorder 1, %s9
    %p112 = scmp.lt.s32.totalorder %s9, 3
    %p113 = pnand %p111, %p112
    %p114 = pneg %p113
    // Predicated region
    $region9: #{lenet5_forward.3} parent=5 // pred_check
      _
    $region10: #{lenet5_forward.3} parent=5 // pred_check_branch
      %116 = sbr.rel (%p113) target = $region12
    $region11: #{lenet5_forward.3} parent=5 // pred_region
      %s117 = ssub.s32 %s9, 1
      // Predicated region
      $region13: #{lenet5_forward.3} parent=11 // pred_check
        %p118 = pneg %p56
      $region14: #{lenet5_forward.3} parent=11 // pred_check_branch
        %120 = sbr.rel (%p118) target = $region16
      $region15: #{lenet5_forward.3} parent=11 // pred_region
        _
      $region16: #{lenet5_forward.3} parent=11 // pred_fallthru
        _
      // Predicated region
      $region17: #{lenet5_forward.3} parent=11 // pred_check
        %p121 = pneg %p77
      $region18: #{lenet5_forward.3} parent=11 // pred_check_branch
        %123 = sbr.rel (%p121) target = $region20
      $region19: #{lenet5_forward.3} parent=11 // pred_region
        _
      $region20: #{lenet5_forward.3} parent=11 // pred_fallthru
        _
    $region12: #{lenet5_forward.3} parent=5 // pred_fallthru
      _
    %p124 = scmp.lt.s32.totalorder %s9, 2
    // Predicated region
    $region21: #{lenet5_forward.3} parent=5 // pred_check
      %p125 = pneg %p124
    $region22: #{lenet5_forward.3} parent=5 // pred_check_branch
      %127 = sbr.rel (%p125) target = $region24
    $region23: #{lenet5_forward.3} parent=5 // pred_region
      // Predicated region
      $region25: #{lenet5_forward.3} parent=23 // pred_check
        %p128 = pneg %p29
      $region26: #{lenet5_forward.3} parent=23 // pred_check_branch
        %130 = sbr.rel (%p128) target = $region28
      $region27: #{lenet5_forward.3} parent=23 // pred_region
        %p131 = scmp.lt.s32.totalorder %s9, 1
        %s132 = scalar_select %p131, %s9, 1
        %s133 = smul.addr %s132, 28
        %s134 = smul.addr %s133, 4
        %s135 = scalar_lea.vmem %s0, %s134
      $region28: #{lenet5_forward.3} parent=23 // pred_fallthru
        _
    $region24: #{lenet5_forward.3} parent=5 // pred_fallthru
      _
    %p136 = scmp.le.s32.totalorder 1, %s9
    %p137 = scmp.lt.s32.totalorder %s9, 3
    %p138 = pnand %p136, %p137
    %p139 = pneg %p138
    // Predicated region
    $region29: #{lenet5_forward.3} parent=5 // pred_check
      _
    $region30: #{lenet5_forward.3} parent=5 // pred_check_branch
      %141 = sbr.rel (%p138) target = $region32
    $region31: #{lenet5_forward.3} parent=5 // pred_region
      %s142 = ssub.s32 %s9, 1
      %p143 = scmp.lt.s32.totalorder %s14, 1
      %s144 = scalar_select %p143, %s14, 1
      %s145 = smul.addr %s144, 28
      %s146 = smul.addr %s145, 4
      %s147 = scalar_lea.vmem %s0, %s146
      %p148 = pneg %p35
      %p149 = pneg %p32
      %p150 = pneg %p56
      %p151 = pneg %p53
      %p152 = pneg %p77
      %p153 = pneg %p74
      %p154 = pneg %p103
      %p155 = pneg %p100
      %p156 = scmp.lt.s32.totalorder %s14, 1
      %s157 = scalar_select %p156, %s14, 1
      %s158 = smul.addr %s157, 7
      %s159 = smul.addr %s158, 8
      %s160 = scalar_lea.vmem %s3, %s159
      %p161 = scmp.lt.s32.totalorder %s14, 1
      %s162 = scalar_select %p161, %s14, 1
      %s163 = smul.addr %s162, 28
      %s164 = smul.addr %s163, 4
      %s165 = scalar_lea.vmem %s0, %s164
      %p166 = scmp.lt.s32.totalorder %s14, 1
      %s167 = scalar_select %p166, %s14, 1
      %s168 = smul.addr %s167, 7
      %s169 = smul.addr %s168, 8
      %s170 = scalar_lea.vmem %s3, %s169
      %v172 = vld [vmem:[%s1] sm:$0x7]
      %v173 = vld [vmem:[%s165] sm:$0xff]
      %v174 = vld [vmem:[%s165 + $0x8] sm:$0xff]
      %v175 = vld [vmem:[%s165 + $0x10] sm:$0xff]
      %v176 = vld [vmem:[%s165 + $0x18] sm:$0xf]
      %v177 = vld [vmem:[%s165 + $0x1c] sm:$0xff]
      %v178 = vld [vmem:[%s165 + $0x24] sm:$0xff]
      %v179 = vld [vmem:[%s165 + $0x2c] sm:$0xff]
      %v180 = vld [vmem:[%s165 + $0x34] sm:$0xf]
      %v181 = vld [vmem:[%s165 + $0x38] sm:$0xff]
      %v182 = vld [vmem:[%s165 + $0x40] sm:$0xff]
      %v183 = vld [vmem:[%s165 + $0x48] sm:$0xff]
      %v184 = vld [vmem:[%s165 + $0x50] sm:$0xf]
      %v185 = vld [vmem:[%s165 + $0x54] sm:$0x11]
      %v186 = vld [vmem:[%s165 + $0x5c] sm:$0x11]
      %v187 = vld [vmem:[%s165 + $0x64] sm:$0x11]
      %v188 = vld [vmem:[%s165 + $0x6c] sm:$0x1]
      %v189 = vld [vmem:[%s2] sm:$0x3f]
      %191 = vset.pattern.permute.xlu0 0
      %192 = vperm.xlu0 %191, %v189
      %v193 = vpop.permute.xlu0 %192
      %v211 = vunpack.c.l.b16 %v173
      %v212 = vunpack.c.h.b16 %v173
      %v213 = vunpack.c.l.b16 %v174
      %v214 = vunpack.c.h.b16 %v174
      %v215 = vunpack.c.l.b16 %v175
      %v216 = vunpack.c.h.b16 %v175
      %v217 = vunpack.c.l.b16 %v176
      %v218 = vunpack.c.l.b16 %v177
      %v219 = vunpack.c.h.b16 %v177
      %v220 = vunpack.c.l.b16 %v178
      %v221 = vunpack.c.h.b16 %v178
      %v222 = vunpack.c.l.b16 %v179
      %v223 = vunpack.c.h.b16 %v179
      %v224 = vunpack.c.l.b16 %v180
      %v225 = vunpack.c.l.b16 %v181
      %v226 = vunpack.c.h.b16 %v181
      %v227 = vunpack.c.l.b16 %v182
      %v228 = vunpack.c.h.b16 %v182
      %v229 = vunpack.c.l.b16 %v183
      %v230 = vunpack.c.h.b16 %v183
      %v231 = vunpack.c.l.b16 %v184
      %v232 = vunpack.c.l.b16 %v185
      %v233 = vunpack.c.h.b16 %v185
      %v234 = vunpack.c.l.b16 %v186
      %v235 = vunpack.c.h.b16 %v186
      %v236 = vunpack.c.l.b16 %v187
      %v237 = vunpack.c.h.b16 %v187
      %v238 = vunpack.c.l.b16 %v188
      %v239 = vpack.c.b16 %v218, %v211
      %v240 = vpack.c.b16 %v219, %v212
      %v241 = vpack.c.b16 %v220, %v213
      %v242 = vpack.c.b16 %v221, %v214
      %v243 = vpack.c.b16 %v222, %v215
      %v244 = vpack.c.b16 %v223, %v216
      %v245 = vpack.c.b16 %v224, %v217
      %v246 = vpack.c.b16 %v232, %v225
      %v247 = vpack.c.b16 %v233, %v226
      %v248 = vpack.c.b16 %v234, %v227
      %v249 = vpack.c.b16 %v235, %v228
      %v250 = vpack.c.b16 %v236, %v229
      %v251 = vpack.c.b16 %v237, %v230
      %v252 = vpack.c.b16 %v238, %v231
      %vm260 = vcmask 203776
      %v262 = vsel %vm260, %v172, 0
      %vm264 = vcmask 1043456
      %vm265 = vcmask 1044480
      %v266 = vsel %vm264, 4294967295, 65535
      %v267 = vsel %vm265, %v266, 0
      %v269 = vand.u32 %v246, %v267
      %v272 = vand.u32 %v247, %v267
      %v275 = vand.u32 %v248, %v267
      %v278 = vand.u32 %v249, %v267
      %v281 = vand.u32 %v250, %v267
      %v284 = vand.u32 %v251, %v267
      %v287 = vand.u32 %v252, %v267
      %289 = vmatpush.bf16.msra.mxu0 0
      %290 = vmatpush.bf16.msra.mxu0 0
      %291 = vmatpush.bf16.msra.mxu0 0
      %292 = vmatpush.bf16.msra.mxu0 0
      %293 = vmatpush.bf16.msra.mxu0 0
      %294 = vmatpush.bf16.msra.mxu0 0
      %295 = vmatpush.bf16.msra.mxu0 %v269
      %296 = vmatpush.bf16.msra.mxu0 %v239
      %297 = vmatmul.bf16.gmra.mxu0 %v262
      %v298 = vpop.f32.mrf.mxu0
      %v299 = vadd.f32 %v193, %v298
      %v300 = vpop.f32.mrf.mxu0
      %301 = vdwg.mxu0
      %302 = vmatpush.bf16.msra.mxu0 0
      %303 = vmatpush.bf16.msra.mxu0 0
      %304 = vmatpush.bf16.msra.mxu0 0
      %305 = vmatpush.bf16.msra.mxu0 0
      %306 = vmatpush.bf16.msra.mxu0 0
      %307 = vmatpush.bf16.msra.mxu0 0
      %308 = vmatpush.bf16.msra.mxu0 %v272
      %309 = vmatpush.bf16.msra.mxu0 %v240
      %310 = vmatmul.bf16.gmra.mxu0 %v262
      %v311 = vpop.f32.mrf.mxu0
      %v312 = vadd.f32 %v193, %v311
      %v313 = vpop.f32.mrf.mxu0
      %314 = vdwg.mxu0
      %315 = vmatpush.bf16.msra.mxu0 0
      %316 = vmatpush.bf16.msra.mxu0 0
      %317 = vmatpush.bf16.msra.mxu0 0
      %318 = vmatpush.bf16.msra.mxu0 0
      %319 = vmatpush.bf16.msra.mxu0 0
      %320 = vmatpush.bf16.msra.mxu0 0
      %321 = vmatpush.bf16.msra.mxu0 %v275
      %322 = vmatpush.bf16.msra.mxu0 %v241
      %323 = vmatmul.bf16.gmra.mxu0 %v262
      %v324 = vpop.f32.mrf.mxu0
      %v325 = vadd.f32 %v193, %v324
      %v326 = vpop.f32.mrf.mxu0
      %327 = vdwg.mxu0
      %328 = vmatpush.bf16.msra.mxu0 0
      %329 = vmatpush.bf16.msra.mxu0 0
      %330 = vmatpush.bf16.msra.mxu0 0
      %331 = vmatpush.bf16.msra.mxu0 0
      %332 = vmatpush.bf16.msra.mxu0 0
      %333 = vmatpush.bf16.msra.mxu0 0
      %334 = vmatpush.bf16.msra.mxu0 %v278
      %335 = vmatpush.bf16.msra.mxu0 %v242
      %336 = vmatmul.bf16.gmra.mxu0 %v262
      %v337 = vpop.f32.mrf.mxu0
      %v338 = vadd.f32 %v193, %v337
      %v339 = vpop.f32.mrf.mxu0
      %340 = vdwg.mxu0
      %341 = vmatpush.bf16.msra.mxu0 0
      %342 = vmatpush.bf16.msra.mxu0 0
      %343 = vmatpush.bf16.msra.mxu0 0
      %344 = vmatpush.bf16.msra.mxu0 0
      %345 = vmatpush.bf16.msra.mxu0 0
      %346 = vmatpush.bf16.msra.mxu0 0
      %347 = vmatpush.bf16.msra.mxu0 %v281
      %348 = vmatpush.bf16.msra.mxu0 %v243
      %349 = vmatmul.bf16.gmra.mxu0 %v262
      %v350 = vpop.f32.mrf.mxu0
      %v351 = vadd.f32 %v193, %v350
      %v352 = vpop.f32.mrf.mxu0
      %353 = vdwg.mxu0
      %354 = vmatpush.bf16.msra.mxu0 0
      %355 = vmatpush.bf16.msra.mxu0 0
      %356 = vmatpush.bf16.msra.mxu0 0
      %357 = vmatpush.bf16.msra.mxu0 0
      %358 = vmatpush.bf16.msra.mxu0 0
      %359 = vmatpush.bf16.msra.mxu0 0
      %360 = vmatpush.bf16.msra.mxu0 %v284
      %361 = vmatpush.bf16.msra.mxu0 %v244
      %362 = vmatmul.bf16.gmra.mxu0 %v262
      %v363 = vpop.f32.mrf.mxu0
      %v364 = vadd.f32 %v193, %v363
      %v365 = vpop.f32.mrf.mxu0
      %366 = vdwg.mxu0
      %367 = vmatpush.bf16.msra.mxu0 0
      %368 = vmatpush.bf16.msra.mxu0 0
      %369 = vmatpush.bf16.msra.mxu0 0
      %370 = vmatpush.bf16.msra.mxu0 0
      %371 = vmatpush.bf16.msra.mxu0 0
      %372 = vmatpush.bf16.msra.mxu0 0
      %373 = vmatpush.bf16.msra.mxu0 %v287
      %374 = vmatpush.bf16.msra.mxu0 %v245
      %375 = vmatmul.bf16.gmra.mxu0 %v262
      %v376 = vpop.f32.mrf.mxu0
      %v377 = vadd.f32 %v193, %v376
      %v378 = vpop.f32.mrf.mxu0
      %379 = vdwg.mxu0
      %v380 = vtanh.pop %v299
      %v381 = vtanh.pop %v312
      %v382 = vtanh.pop %v325
      %v383 = vtanh.pop %v338
      %v384 = vtanh.pop %v351
      %v385 = vtanh.pop %v364
      %v386 = vtanh.pop %v377
      %387 = vst [vmem:[%s170] sm:$0x3f] %v380
      %388 = vst [vmem:[%s170 + $0x8] sm:$0x3f] %v381
      %389 = vst [vmem:[%s170 + $0x10] sm:$0x3f] %v382
      %390 = vst [vmem:[%s170 + $0x18] sm:$0x3f] %v383
      %391 = vst [vmem:[%s170 + $0x20] sm:$0x3f] %v384
      %392 = vst [vmem:[%s170 + $0x28] sm:$0x3f] %v385
      %vm393 = vcmask 128000
      %394 = vst.msk [vmem:[%s170 + $0x30] sm:$0x3f] %vm393, %v386
      %p395 = scmp.lt.s32.totalorder %s14, 1
      %s396 = scalar_select %p395, %s14, 1
      %s397 = smul.addr %s396, 7
      %s398 = smul.addr %s397, 8
      %s399 = scalar_lea.vmem %s3, %s398
      // Predicated region
      $region33: #{lenet5_forward.3} parent=31 // pred_check
        %p400 = pneg %p100
      $region34: #{lenet5_forward.3} parent=31 // pred_check_branch
        %402 = sbr.rel (%p400) target = $region36
      $region35: #{lenet5_forward.3} parent=31 // pred_region
        _
      $region36: #{lenet5_forward.3} parent=31 // pred_fallthru
        _
    $region32: #{lenet5_forward.3} parent=5 // pred_fallthru
      _
    %p403 = scmp.le.s32.totalorder 2, %s9
    // Predicated region
    $region37: #{lenet5_forward.3} parent=5 // pred_check
      %p404 = pneg %p403
    $region38: #{lenet5_forward.3} parent=5 // pred_check_branch
      %406 = sbr.rel (%p404) target = $region40
    $region39: #{lenet5_forward.3} parent=5 // pred_region
      %s407 = ssub.s32 %s9, 2
      // Predicated region
      $region41: #{lenet5_forward.3} parent=39 // pred_check
        %p408 = pneg %p106
      $region42: #{lenet5_forward.3} parent=39 // pred_check_branch
        %410 = sbr.rel (%p408) target = $region44
      $region43: #{lenet5_forward.3} parent=39 // pred_region
        %p411 = scmp.lt.s32.totalorder %s15, 1
        %s412 = scalar_select %p411, %s15, 1
        %s413 = smul.addr %s412, 7
        %s414 = smul.addr %s413, 8
        %s415 = scalar_lea.vmem %s3, %s414
      $region44: #{lenet5_forward.3} parent=39 // pred_fallthru
        _
    $region40: #{lenet5_forward.3} parent=5 // pred_fallthru
      _
  $region6: #{lenet5_forward.3} parent=0 // loop_footer
    %s13 = sadd.s32 1, %s9
  $region7: #{lenet5_forward.3} parent=0 // loop_footer_branch
    %8 = sbr.rel target = $region3
  $region8: #{lenet5_forward.3} parent=0 // loop_exit
    _

// kernel: lenet5_forward.4
$region0: #{lenet5_forward.4}
  #allocation0 [shape = 'u32[]', space=smem, size = 0x4, offset = 0x4, fixed_abs, tag = 'smem constant byte address 0x4 - core index']
  #allocation1 [shape = 'u32[72,128]{1,0:T(1,128)}', space=vmem, size = 0x9000, scoped, tag = 'internal scratch']
  %s0 = inlined_call_operand.vmem [shape: bf16[2,150,100], index: 0, kind: input, shape index: {}]
  %s1 = inlined_call_operand.vmem [shape: bf16[16,150], index: 1, kind: input, shape index: {}]
  %s2 = inlined_call_operand.vmem [shape: f32[16,1], index: 2, kind: input, shape index: {}]
  %s3 = inlined_call_operand.vmem [shape: f32[2,16,100], index: 3, kind: output, shape index: {}]
  %s4 = sld [smem:[#allocation0]]
  $region45: #{lenet5_forward.4} parent=0
    _
  %s6 = ssub.s32 1, %s4
  %s7 = scalar_select 0, %s6, %s4
  loop: start=0, step=1, limit=4
  $region2: #{lenet5_forward.4} parent=0 // loop_pre_header
    _
  $region3: #{lenet5_forward.4} parent=0 // loop_header
    %s9 = sphi 0, %s13
    %p10 = scmp.ge.s32.totalorder %s9, 4
    %s19 = sphi 0, %s21
    %s22 = sphi 0, %s19
    %s23 = sphi 0, %s22
    %s39 = sphi 0, %s23
    %s43 = sphi 0, %s43
    %s45 = sphi 0, %s43
    %s46 = sphi 0, %s45
    %s60 = sphi 0, %s46
    %s64 = sphi 0, %s64
    %s66 = sphi 0, %s64
    %s67 = sphi 0, %s66
    %s81 = sphi 0, %s67
    %s87 = sphi 0, %s89
    %s90 = sphi 0, %s87
    %s91 = sphi 0, %s90
    %s107 = sphi 0, %s91
  $region4: #{lenet5_forward.4} parent=0 // loop_header_branch
    %12 = sbr.rel (%p10) target = $region8
  $region5: #{lenet5_forward.4} parent=0 // loop_body
    %s14 = ssub.s32 %s9, 1
    %s15 = ssub.s32 %s9, 2
    %s16 = sadd.s32 %s9, 1
    %s17 = ssub.s32 %s9, %s16
    %p18 = scmp.eq.s32.totalorder %s17, 0
    %s20 = sadd.s32 %s19, 1
    %s21 = scalar_select %p18, %s19, %s20
    %p24 = pneg %p18
    %p25 = scmp.eq.s32.totalorder %s9, 1
    %p26 = por %p24, %p25
    %p27 = scmp.ne.s32.totalorder %s19, %s22
    %p28 = scmp.eq.s32.totalorder %s9, 0
    %p29 = por %p27, %p28
    %p30 = scmp.ne.s32.totalorder %s19, %s22
    %p31 = scmp.eq.s32.totalorder %s14, 1
    %p32 = por %p30, %p31
    %p33 = scmp.ne.s32.totalorder %s22, %s23
    %p34 = scmp.eq.s32.totalorder %s14, 0
    %p35 = por %p33, %p34
    %p36 = scmp.ne.s32.totalorder %s22, %s23
    %p37 = scmp.eq.s32.totalorder %s15, 1
    %p38 = por %p36, %p37
    %p40 = scmp.ne.s32.totalorder %s23, %s39
    %p41 = scmp.eq.s32.totalorder %s15, 0
    %p42 = por %p40, %p41
    %s44 = sadd.s32 %s43, 1
    %p47 = scmp.eq.s32.totalorder %s9, 1
    %p48 = scmp.ne.s32.totalorder %s43, %s45
    %p49 = scmp.eq.s32.totalorder %s9, 0
    %p50 = por %p48, %p49
    %p51 = scmp.ne.s32.totalorder %s43, %s45
    %p52 = scmp.eq.s32.totalorder %s14, 1
    %p53 = por %p51, %p52
    %p54 = scmp.ne.s32.totalorder %s45, %s46
    %p55 = scmp.eq.s32.totalorder %s14, 0
    %p56 = por %p54, %p55
    %p57 = scmp.ne.s32.totalorder %s45, %s46
    %p58 = scmp.eq.s32.totalorder %s15, 1
    %p59 = por %p57, %p58
    %p61 = scmp.ne.s32.totalorder %s46, %s60
    %p62 = scmp.eq.s32.totalorder %s15, 0
    %p63 = por %p61, %p62
    %s65 = sadd.s32 %s64, 1
    %p68 = scmp.eq.s32.totalorder %s9, 1
    %p69 = scmp.ne.s32.totalorder %s64, %s66
    %p70 = scmp.eq.s32.totalorder %s9, 0
    %p71 = por %p69, %p70
    %p72 = scmp.ne.s32.totalorder %s64, %s66
    %p73 = scmp.eq.s32.totalorder %s14, 1
    %p74 = por %p72, %p73
    %p75 = scmp.ne.s32.totalorder %s66, %s67
    %p76 = scmp.eq.s32.totalorder %s14, 0
    %p77 = por %p75, %p76
    %p78 = scmp.ne.s32.totalorder %s66, %s67
    %p79 = scmp.eq.s32.totalorder %s15, 1
    %p80 = por %p78, %p79
    %p82 = scmp.ne.s32.totalorder %s67, %s81
    %p83 = scmp.eq.s32.totalorder %s15, 0
    %p84 = por %p82, %p83
    %s85 = ssub.s32 %s9, %s16
    %p86 = scmp.eq.s32.totalorder %s85, 0
    %s88 = sadd.s32 %s87, 1
    %s89 = scalar_select %p86, %s87, %s88
    %p92 = pneg %p86
    %p93 = scmp.eq.s32.totalorder %s9, 1
    %p94 = por %p92, %p93
    %p95 = scmp.ne.s32.totalorder %s87, %s90
    %p96 = scmp.eq.s32.totalorder %s9, 0
    %p97 = por %p95, %p96
    %p98 = scmp.ne.s32.totalorder %s87, %s90
    %p99 = scmp.eq.s32.totalorder %s14, 1
    %p100 = por %p98, %p99
    %p101 = scmp.ne.s32.totalorder %s90, %s91
    %p102 = scmp.eq.s32.totalorder %s14, 0
    %p103 = por %p101, %p102
    %p104 = scmp.ne.s32.totalorder %s90, %s91
    %p105 = scmp.eq.s32.totalorder %s15, 1
    %p106 = por %p104, %p105
    %p108 = scmp.ne.s32.totalorder %s91, %s107
    %p109 = scmp.eq.s32.totalorder %s15, 0
    %p110 = por %p108, %p109
    %p111 = scmp.le.s32.totalorder 1, %s9
    %p112 = scmp.lt.s32.totalorder %s9, 3
    %p113 = pnand %p111, %p112
    %p114 = pneg %p113
    // Predicated region
    $region9: #{lenet5_forward.4} parent=5 // pred_check
      _
    $region10: #{lenet5_forward.4} parent=5 // pred_check_branch
      %116 = sbr.rel (%p113) target = $region12
    $region11: #{lenet5_forward.4} parent=5 // pred_region
      %s117 = ssub.s32 %s9, 1
      // Predicated region
      $region13: #{lenet5_forward.4} parent=11 // pred_check
        %p118 = pneg %p56
      $region14: #{lenet5_forward.4} parent=11 // pred_check_branch
        %120 = sbr.rel (%p118) target = $region16
      $region15: #{lenet5_forward.4} parent=11 // pred_region
        _
      $region16: #{lenet5_forward.4} parent=11 // pred_fallthru
        _
      // Predicated region
      $region17: #{lenet5_forward.4} parent=11 // pred_check
        %p121 = pneg %p77
      $region18: #{lenet5_forward.4} parent=11 // pred_check_branch
        %123 = sbr.rel (%p121) target = $region20
      $region19: #{lenet5_forward.4} parent=11 // pred_region
        _
      $region20: #{lenet5_forward.4} parent=11 // pred_fallthru
        _
    $region12: #{lenet5_forward.4} parent=5 // pred_fallthru
      _
    %p124 = scmp.lt.s32.totalorder %s9, 2
    // Predicated region
    $region21: #{lenet5_forward.4} parent=5 // pred_check
      %p125 = pneg %p124
    $region22: #{lenet5_forward.4} parent=5 // pred_check_branch
      %127 = sbr.rel (%p125) target = $region24
    $region23: #{lenet5_forward.4} parent=5 // pred_region
      // Predicated region
      $region25: #{lenet5_forward.4} parent=23 // pred_check
        %p128 = pneg %p29
      $region26: #{lenet5_forward.4} parent=23 // pred_check_branch
        %130 = sbr.rel (%p128) target = $region28
      $region27: #{lenet5_forward.4} parent=23 // pred_region
        %p131 = scmp.lt.s32.totalorder %s9, 1
        %s132 = scalar_select %p131, %s9, 1
        %s133 = smul.addr %s132, 19
        %s134 = smul.addr %s133, 4
        %s135 = scalar_lea.vmem %s0, %s134
      $region28: #{lenet5_forward.4} parent=23 // pred_fallthru
        _
    $region24: #{lenet5_forward.4} parent=5 // pred_fallthru
      _
    %p136 = scmp.le.s32.totalorder 1, %s9
    %p137 = scmp.lt.s32.totalorder %s9, 3
    %p138 = pnand %p136, %p137
    %p139 = pneg %p138
    // Predicated region
    $region29: #{lenet5_forward.4} parent=5 // pred_check
      _
    $region30: #{lenet5_forward.4} parent=5 // pred_check_branch
      %141 = sbr.rel (%p138) target = $region32
    $region31: #{lenet5_forward.4} parent=5 // pred_region
      %s142 = ssub.s32 %s9, 1
      %p143 = scmp.lt.s32.totalorder %s14, 1
      %s144 = scalar_select %p143, %s14, 1
      %s145 = smul.addr %s144, 19
      %s146 = smul.addr %s145, 4
      %s147 = scalar_lea.vmem %s0, %s146
      %p148 = pneg %p35
      %p149 = pneg %p32
      %p150 = pneg %p56
      %p151 = pneg %p53
      %p152 = pneg %p77
      %p153 = pneg %p74
      %p154 = pneg %p103
      %p155 = pneg %p100
      %p156 = scmp.lt.s32.totalorder %s14, 1
      %s157 = scalar_select %p156, %s14, 1
      %s158 = smul.addr %s157, 2
      %s159 = smul.addr %s158, 8
      %s160 = scalar_lea.vmem %s3, %s159
      %p161 = scmp.lt.s32.totalorder %s14, 1
      %s162 = scalar_select %p161, %s14, 1
      %s163 = smul.addr %s162, 19
      %s164 = smul.addr %s163, 4
      %s165 = scalar_lea.vmem %s0, %s164
      %p166 = scmp.lt.s32.totalorder %s14, 1
      %s167 = scalar_select %p166, %s14, 1
      %s168 = smul.addr %s167, 2
      %s169 = smul.addr %s168, 8
      %s170 = scalar_lea.vmem %s3, %s169
      %v172 = vld [vmem:[%s1] sm:$0xff]
      %v173 = vld [vmem:[%s1 + $0x8] sm:$0xff]
      %v174 = vld [vmem:[%s165] sm:$0xf]
      %v175 = vld [vmem:[%s165 + $0x4] sm:$0xf]
      %v176 = vld [vmem:[%s165 + $0x8] sm:$0xf]
      %v177 = vld [vmem:[%s165 + $0xc] sm:$0xf]
      %v178 = vld [vmem:[%s165 + $0x10] sm:$0xf]
      %v179 = vld [vmem:[%s165 + $0x14] sm:$0xf]
      %v180 = vld [vmem:[%s165 + $0x18] sm:$0xf]
      %v181 = vld [vmem:[%s165 + $0x1c] sm:$0xf]
      %v182 = vld [vmem:[%s165 + $0x20] sm:$0xf]
      %v183 = vld [vmem:[%s165 + $0x24] sm:$0xf]
      %v184 = vld [vmem:[%s165 + $0x28] sm:$0xf]
      %v185 = vld [vmem:[%s165 + $0x2c] sm:$0xf]
      %v186 = vld [vmem:[%s165 + $0x30] sm:$0xf]
      %v187 = vld [vmem:[%s165 + $0x34] sm:$0xf]
      %v188 = vld [vmem:[%s165 + $0x38] sm:$0xf]
      %v189 = vld [vmem:[%s165 + $0x3c] sm:$0xf]
      %v190 = vld [vmem:[%s165 + $0x40] sm:$0xf]
      %v191 = vld [vmem:[%s165 + $0x44] sm:$0xf]
      %v192 = vld [vmem:[%s165 + $0x48] sm:$0x7]
      %v193 = vld [vmem:[%s2] sm:$0xff]
      %v194 = vld [vmem:[%s2 + $0x8] sm:$0xff]
      %196 = vset.pattern.permute.xlu0 0
      %197 = vperm.xlu0 %196, %v193
      %v198 = vpop.permute.xlu0 %197
      %201 = vset.pattern.permute.xlu0 0
      %202 = vperm.xlu0 %201, %v194
      %v203 = vpop.permute.xlu0 %202
      %v207 = vunpack.c.l.b16 %v172
      %v208 = vunpack.c.h.b16 %v172
      %v209 = vunpack.c.l.b16 %v173
      %v210 = vunpack.c.h.b16 %v173
      %v211 = vpack.c.b16 %v209, %v207
      %v212 = vpack.c.b16 %v210, %v208
      %v233 = vunpack.c.l.b16 %v174
      %v234 = vunpack.c.l.b16 %v175
      %v235 = vunpack.c.l.b16 %v176
      %v236 = vunpack.c.l.b16 %v177
      %v237 = vunpack.c.l.b16 %v178
      %v238 = vunpack.c.l.b16 %v179
      %v239 = vunpack.c.l.b16 %v180
      %v240 = vunpack.c.l.b16 %v181
      %v241 = vunpack.c.l.b16 %v182
      %v242 = vunpack.c.l.b16 %v183
      %v243 = vunpack.c.l.b16 %v184
      %v244 = vunpack.c.l.b16 %v185
      %v245 = vunpack.c.l.b16 %v186
      %v246 = vunpack.c.l.b16 %v187
      %v247 = vunpack.c.l.b16 %v188
      %v248 = vunpack.c.l.b16 %v189
      %v249 = vunpack.c.l.b16 %v190
      %v250 = vunpack.c.l.b16 %v191
      %v251 = vunpack.c.l.b16 %v192
      %v252 = vpack.c.b16 %v234, %v233
      %v253 = vpack.c.b16 %v236, %v235
      %v254 = vpack.c.b16 %v238, %v237
      %v255 = vpack.c.b16 %v240, %v239
      %v256 = vpack.c.b16 %v242, %v241
      %v257 = vpack.c.b16 %v244, %v243
      %v258 = vpack.c.b16 %v246, %v245
      %v259 = vpack.c.b16 %v248, %v247
      %v260 = vpack.c.b16 %v250, %v249
      %v261 = vpack.c.b16 %v251, %v251
      %vm271 = vcmask 179200
      %v273 = vsel %vm271, %v212, 0
      %vm275 = vcmask 1042432
      %v277 = vsel %vm275, %v261, 0
      %279 = vmatpush.bf16.msra.mxu0 %v259
      %280 = vmatpush.bf16.msra.mxu0 %v258
      %281 = vmatpush.bf16.msra.mxu0 %v257
      %282 = vmatpush.bf16.msra.mxu0 %v256
      %283 = vmatpush.bf16.msra.mxu0 %v255
      %284 = vmatpush.bf16.msra.mxu0 %v254
      %285 = vmatpush.bf16.msra.mxu0 %v253
      %286 = vmatpush.bf16.msra.mxu0 %v252
      %287 = vmatmul.bf16.gmra.mxu0 %v211
      %v288 = vpop.f32.mrf.mxu0
      %v289 = vadd.f32 %v198, %v288
      %v290 = vpop.f32.mrf.mxu0
      %v291 = vadd.f32 %v203, %v290
      %292 = vdwg.mxu0
      %293 = vmatpush.bf16.msra.mxu0 0
      %294 = vmatpush.bf16.msra.mxu0 0
      %295 = vmatpush.bf16.msra.mxu0 0
      %296 = vmatpush.bf16.msra.mxu0 0
      %297 = vmatpush.bf16.msra.mxu0 0
      %298 = vmatpush.bf16.msra.mxu0 0
      %299 = vmatpush.bf16.msra.mxu0 %v277
      %300 = vmatpush.bf16.msra.mxu0 %v260
      %301 = vmatmul.bf16.gmra.mxu0 %v273
      %v302 = vpop.f32.mrf.mxu0
      %v303 = vadd.f32 %v289, %v302
      %v304 = vpop.f32.mrf.mxu0
      %v305 = vadd.f32 %v291, %v304
      %306 = vdwg.mxu0
      %v307 = vtanh.pop %v303
      %v308 = vtanh.pop %v305
      %vm309 = vcmask 818176
      %310 = vst.msk [vmem:[%s170] sm:$0xff] %vm309, %v307
      %311 = vst.msk [vmem:[%s170 + $0x8] sm:$0xff] %vm309, %v308
      %p312 = scmp.lt.s32.totalorder %s14, 1
      %s313 = scalar_select %p312, %s14, 1
      %s314 = smul.addr %s313, 2
      %s315 = smul.addr %s314, 8
      %s316 = scalar_lea.vmem %s3, %s315
      // Predicated region
      $region33: #{lenet5_forward.4} parent=31 // pred_check
        %p317 = pneg %p100
      $region34: #{lenet5_forward.4} parent=31 // pred_check_branch
        %319 = sbr.rel (%p317) target = $region36
      $region35: #{lenet5_forward.4} parent=31 // pred_region
        _
      $region36: #{lenet5_forward.4} parent=31 // pred_fallthru
        _
    $region32: #{lenet5_forward.4} parent=5 // pred_fallthru
      _
    %p320 = scmp.le.s32.totalorder 2, %s9
    // Predicated region
    $region37: #{lenet5_forward.4} parent=5 // pred_check
      %p321 = pneg %p320
    $region38: #{lenet5_forward.4} parent=5 // pred_check_branch
      %323 = sbr.rel (%p321) target = $region40
    $region39: #{lenet5_forward.4} parent=5 // pred_region
      %s324 = ssub.s32 %s9, 2
      // Predicated region
      $region41: #{lenet5_forward.4} parent=39 // pred_check
        %p325 = pneg %p106
      $region42: #{lenet5_forward.4} parent=39 // pred_check_branch
        %327 = sbr.rel (%p325) target = $region44
      $region43: #{lenet5_forward.4} parent=39 // pred_region
        %p328 = scmp.lt.s32.totalorder %s15, 1
        %s329 = scalar_select %p328, %s15, 1
        %s330 = smul.addr %s329, 2
        %s331 = smul.addr %s330, 8
        %s332 = scalar_lea.vmem %s3, %s331
      $region44: #{lenet5_forward.4} parent=39 // pred_fallthru
        _
    $region40: #{lenet5_forward.4} parent=5 // pred_fallthru
      _
  $region6: #{lenet5_forward.4} parent=0 // loop_footer
    %s13 = sadd.s32 1, %s9
  $region7: #{lenet5_forward.4} parent=0 // loop_footer_branch
    %8 = sbr.rel target = $region3
  $region8: #{lenet5_forward.4} parent=0 // loop_exit
    _

// kernel: lenet5_forward.5
$region0: #{lenet5_forward.5}
  #allocation0 [shape = 'u32[]', space=smem, size = 0x4, offset = 0x4, fixed_abs, tag = 'smem constant byte address 0x4 - core index']
  #allocation1 [shape = 'u32[72,128]{1,0:T(1,128)}', space=vmem, size = 0x9000, scoped, tag = 'internal scratch']
  %s0 = inlined_call_operand.vmem [shape: bf16[2,400], index: 0, kind: input, shape index: {}]
  %s1 = inlined_call_operand.vmem [shape: bf16[400,120], index: 1, kind: input, shape index: {}]
  %s2 = inlined_call_operand.vmem [shape: f32[1,120], index: 2, kind: input, shape index: {}]
  %s3 = inlined_call_operand.vmem [shape: bf16[120,84], index: 3, kind: input, shape index: {}]
  %s4 = inlined_call_operand.vmem [shape: f32[1,84], index: 4, kind: input, shape index: {}]
  %s5 = inlined_call_operand.vmem [shape: bf16[84,10], index: 5, kind: input, shape index: {}]
  %s6 = inlined_call_operand.vmem [shape: f32[1,10], index: 6, kind: input, shape index: {}]
  %s7 = inlined_call_operand.hbm [shape: f32[2,10], index: 7, kind: output, shape index: {}]
  %s8 = sld [smem:[#allocation0]]
  $region38: #{lenet5_forward.5} parent=0
    _
  %s10 = ssub.s32 1, %s8
  %s11 = scalar_select 0, %s10, %s8
  $region1: #{lenet5_forward.5} parent=0
    #allocation2 [shape = 'u8[1024]{0}', space=vmem, size = 0x400, scoped, tag = 'output window, operand 0, single buffered']
    #allocation3 [shape = 's32[1]{0}', space=sflag, size = 0x4, scoped, tag = 'scoped memory for lenet5_forward.5']
    %12 = vsyncpa [#allocation3], 0
    // Predicated region
    $region2: #{lenet5_forward.5} parent=1 // pred_check
      _
    $region3: #{lenet5_forward.5} parent=1 // pred_check_branch
      %14 = sbr.rel (0) target = $region5
    $region4: #{lenet5_forward.5} parent=1 // pred_region
      _
    $region5: #{lenet5_forward.5} parent=1 // pred_fallthru
      _
    // Predicated region
    $region6: #{lenet5_forward.5} parent=1 // pred_check
      _
    $region7: #{lenet5_forward.5} parent=1 // pred_check_branch
      %16 = sbr.rel (0) target = $region9
    $region8: #{lenet5_forward.5} parent=1 // pred_region
      _
    $region9: #{lenet5_forward.5} parent=1 // pred_fallthru
      _
    // Predicated region
    $region10: #{lenet5_forward.5} parent=1 // pred_check
      _
    $region11: #{lenet5_forward.5} parent=1 // pred_check_branch
      %18 = sbr.rel (0) target = $region13
    $region12: #{lenet5_forward.5} parent=1 // pred_region
      _
    $region13: #{lenet5_forward.5} parent=1 // pred_fallthru
      _
    // Predicated region
    $region14: #{lenet5_forward.5} parent=1 // pred_check
      _
    $region15: #{lenet5_forward.5} parent=1 // pred_check_branch
      %20 = sbr.rel (0) target = $region17
    $region16: #{lenet5_forward.5} parent=1 // pred_region
      _
    $region17: #{lenet5_forward.5} parent=1 // pred_fallthru
      _
    // Predicated region
    $region18: #{lenet5_forward.5} parent=1 // pred_check
      _
    $region19: #{lenet5_forward.5} parent=1 // pred_check_branch
      %22 = sbr.rel (0) target = $region21
    $region20: #{lenet5_forward.5} parent=1 // pred_region
      _
    $region21: #{lenet5_forward.5} parent=1 // pred_fallthru
      _
    // Predicated region
    $region22: #{lenet5_forward.5} parent=1 // pred_check
      _
    $region23: #{lenet5_forward.5} parent=1 // pred_check_branch
      %24 = sbr.rel (0) target = $region25
    $region24: #{lenet5_forward.5} parent=1 // pred_region
      _
    $region25: #{lenet5_forward.5} parent=1 // pred_fallthru
      _
    // Predicated region
    $region26: #{lenet5_forward.5} parent=1 // pred_check
      _
    $region27: #{lenet5_forward.5} parent=1 // pred_check_branch
      %26 = sbr.rel (0) target = $region29
    $region28: #{lenet5_forward.5} parent=1 // pred_region
      _
    $region29: #{lenet5_forward.5} parent=1 // pred_fallthru
      _
    %v28 = vld [vmem:[%s0] sm:$0xf]
    %v29 = vld [vmem:[%s1] sm:$0xf]
    %v30 = vld [vmem:[%s1 + $0x4] sm:$0xf]
    %v31 = vld [vmem:[%s1 + $0x8] sm:$0xf]
    %v32 = vld [vmem:[%s1 + $0xc] sm:$0xf]
    %v33 = vld [vmem:[%s1 + $0x10] sm:$0xf]
    %v34 = vld [vmem:[%s1 + $0x14] sm:$0xf]
    %v35 = vld [vmem:[%s1 + $0x18] sm:$0xf]
    %v36 = vld [vmem:[%s1 + $0x1c] sm:$0xf]
    %v37 = vld [vmem:[%s1 + $0x20] sm:$0xf]
    %v38 = vld [vmem:[%s1 + $0x24] sm:$0xf]
    %v39 = vld [vmem:[%s1 + $0x28] sm:$0xf]
    %v40 = vld [vmem:[%s1 + $0x2c] sm:$0xf]
    %v41 = vld [vmem:[%s1 + $0x30] sm:$0xf]
    %v42 = vld [vmem:[%s1 + $0x34] sm:$0xf]
    %v43 = vld [vmem:[%s1 + $0x38] sm:$0xf]
    %v44 = vld [vmem:[%s1 + $0x3c] sm:$0xf]
    %v45 = vld [vmem:[%s1 + $0x40] sm:$0xf]
    %v46 = vld [vmem:[%s1 + $0x44] sm:$0xf]
    %v47 = vld [vmem:[%s1 + $0x48] sm:$0xf]
    %v48 = vld [vmem:[%s1 + $0x4c] sm:$0xf]
    %v49 = vld [vmem:[%s1 + $0x50] sm:$0xf]
    %v50 = vld [vmem:[%s1 + $0x54] sm:$0xf]
    %v51 = vld [vmem:[%s1 + $0x58] sm:$0xf]
    %v52 = vld [vmem:[%s1 + $0x5c] sm:$0xf]
    %v53 = vld [vmem:[%s1 + $0x60] sm:$0xf]
    %v54 = vld [vmem:[%s1 + $0x64] sm:$0xf]
    %v55 = vld [vmem:[%s1 + $0x68] sm:$0xf]
    %v56 = vld [vmem:[%s1 + $0x6c] sm:$0xf]
    %v57 = vld [vmem:[%s1 + $0x70] sm:$0xf]
    %v58 = vld [vmem:[%s1 + $0x74] sm:$0xf]
    %v59 = vld [vmem:[%s1 + $0x78] sm:$0xf]
    %v60 = vld [vmem:[%s1 + $0x7c] sm:$0xf]
    %v61 = vld [vmem:[%s1 + $0x80] sm:$0xf]
    %v62 = vld [vmem:[%s1 + $0x84] sm:$0xf]
    %v63 = vld [vmem:[%s1 + $0x88] sm:$0xf]
    %v64 = vld [vmem:[%s1 + $0x8c] sm:$0xf]
    %v65 = vld [vmem:[%s1 + $0x90] sm:$0xf]
    %v66 = vld [vmem:[%s1 + $0x94] sm:$0xf]
    %v67 = vld [vmem:[%s1 + $0x98] sm:$0xf]
    %v68 = vld [vmem:[%s1 + $0x9c] sm:$0xf]
    %v69 = vld [vmem:[%s1 + $0xa0] sm:$0xf]
    %v70 = vld [vmem:[%s1 + $0xa4] sm:$0xf]
    %v71 = vld [vmem:[%s1 + $0xa8] sm:$0xf]
    %v72 = vld [vmem:[%s1 + $0xac] sm:$0xf]
    %v73 = vld [vmem:[%s1 + $0xb0] sm:$0xf]
    %v74 = vld [vmem:[%s1 + $0xb4] sm:$0xf]
    %v75 = vld [vmem:[%s1 + $0xb8] sm:$0xf]
    %v76 = vld [vmem:[%s1 + $0xbc] sm:$0xf]
    %v77 = vld [vmem:[%s1 + $0xc0] sm:$0xf]
    %v78 = vld [vmem:[%s1 + $0xc4] sm:$0xf]
    %v79 = vld [vmem:[%s2] sm:$0x1]
    %v81 = vperm.slane %v79, 0
    %84 = vst [vmem:[#allocation1] ss:$9 sm:$0xff] %v28
    %v85 = vld [vmem:[#allocation1] sm:$0xff]
    %v86 = vld [vmem:[#allocation1 + $0x9] sm:$0xff]
    %v87 = vld [vmem:[#allocation1 + $0x12] sm:$0xff]
    %v88 = vld [vmem:[#allocation1 + $0x1b] sm:$0xff]
    %v142 = vunpack.c.l.b16 %v29
    %v143 = vunpack.c.l.b16 %v30
    %v144 = vunpack.c.l.b16 %v31
    %v145 = vunpack.c.l.b16 %v32
    %v146 = vunpack.c.l.b16 %v33
    %v147 = vunpack.c.l.b16 %v34
    %v148 = vunpack.c.l.b16 %v35
    %v149 = vunpack.c.l.b16 %v36
    %v150 = vunpack.c.l.b16 %v37
    %v151 = vunpack.c.l.b16 %v38
    %v152 = vunpack.c.l.b16 %v39
    %v153 = vunpack.c.l.b16 %v40
    %v154 = vunpack.c.l.b16 %v41
    %v155 = vunpack.c.l.b16 %v42
    %v156 = vunpack.c.l.b16 %v43
    %v157 = vunpack.c.l.b16 %v44
    %v158 = vunpack.c.l.b16 %v45
    %v159 = vunpack.c.l.b16 %v46
    %v160 = vunpack.c.l.b16 %v47
    %v161 = vunpack.c.l.b16 %v48
    %v162 = vunpack.c.l.b16 %v49
    %v163 = vunpack.c.l.b16 %v50
    %v164 = vunpack.c.l.b16 %v51
    %v165 = vunpack.c.l.b16 %v52
    %v166 = vunpack.c.l.b16 %v53
    %v167 = vunpack.c.l.b16 %v54
    %v168 = vunpack.c.l.b16 %v55
    %v169 = vunpack.c.l.b16 %v56
    %v170 = vunpack.c.l.b16 %v57
    %v171 = vunpack.c.l.b16 %v58
    %v172 = vunpack.c.l.b16 %v59
    %v173 = vunpack.c.l.b16 %v60
    %v174 = vunpack.c.l.b16 %v61
    %v175 = vunpack.c.l.b16 %v62
    %v176 = vunpack.c.l.b16 %v63
    %v177 = vunpack.c.l.b16 %v64
    %v178 = vunpack.c.l.b16 %v65
    %v179 = vunpack.c.l.b16 %v66
    %v180 = vunpack.c.l.b16 %v67
    %v181 = vunpack.c.l.b16 %v68
    %v182 = vunpack.c.l.b16 %v69
    %v183 = vunpack.c.l.b16 %v70
    %v184 = vunpack.c.l.b16 %v71
    %v185 = vunpack.c.l.b16 %v72
    %v186 = vunpack.c.l.b16 %v73
    %v187 = vunpack.c.l.b16 %v74
    %v188 = vunpack.c.l.b16 %v75
    %v189 = vunpack.c.l.b16 %v76
    %v190 = vunpack.c.l.b16 %v77
    %v191 = vunpack.c.l.b16 %v78
    %v192 = vpack.c.b16 %v143, %v142
    %v193 = vpack.c.b16 %v145, %v144
    %v194 = vpack.c.b16 %v147, %v146
    %v195 = vpack.c.b16 %v149, %v148
    %v196 = vpack.c.b16 %v151, %v150
    %v197 = vpack.c.b16 %v153, %v152
    %v198 = vpack.c.b16 %v155, %v154
    %v199 = vpack.c.b16 %v157, %v156
    %v200 = vpack.c.b16 %v159, %v158
    %v201 = vpack.c.b16 %v161, %v160
    %v202 = vpack.c.b16 %v163, %v162
    %v203 = vpack.c.b16 %v165, %v164
    %v204 = vpack.c.b16 %v167, %v166
    %v205 = vpack.c.b16 %v169, %v168
    %v206 = vpack.c.b16 %v171, %v170
    %v207 = vpack.c.b16 %v173, %v172
    %v208 = vpack.c.b16 %v175, %v174
    %v209 = vpack.c.b16 %v177, %v176
    %v210 = vpack.c.b16 %v179, %v178
    %v211 = vpack.c.b16 %v181, %v180
    %v212 = vpack.c.b16 %v183, %v182
    %v213 = vpack.c.b16 %v185, %v184
    %v214 = vpack.c.b16 %v187, %v186
    %v215 = vpack.c.b16 %v189, %v188
    %v216 = vpack.c.b16 %v191, %v190
    %vm242 = vcmask 130048
    %v243 = vsel %vm242, %v88, 0
    %245 = vmatpush.bf16.msra.mxu0 %v199
    %246 = vmatpush.bf16.msra.mxu0 %v198
    %247 = vmatpush.bf16.msra.mxu0 %v197
    %248 = vmatpush.bf16.msra.mxu0 %v196
    %249 = vmatpush.bf16.msra.mxu0 %v195
    %250 = vmatpush.bf16.msra.mxu0 %v194
    %251 = vmatpush.bf16.msra.mxu0 %v193
    %252 = vmatpush.bf16.msra.mxu0 %v192
    %253 = vmatmul.bf16.gmra.mxu0 %v85
    %v254 = vpop.f32.mrf.mxu0
    %v255 = vadd.f32 %v81, %v254
    %v256 = vpop.f32.mrf.mxu0
    %257 = vdwg.mxu0
    %258 = vmatpush.bf16.msra.mxu0 %v207
    %259 = vmatpush.bf16.msra.mxu0 %v206
    %260 = vmatpush.bf16.msra.mxu0 %v205
    %261 = vmatpush.bf16.msra.mxu0 %v204
    %262 = vmatpush.bf16.msra.mxu0 %v203
    %263 = vmatpush.bf16.msra.mxu0 %v202
    %264 = vmatpush.bf16.msra.mxu0 %v201
    %265 = vmatpush.bf16.msra.mxu0 %v200
    %266 = vmatmul.bf16.gmra.mxu0 %v86
    %v267 = vpop.f32.mrf.mxu0
    %v268 = vadd.f32 %v255, %v267
    %v269 = vpop.f32.mrf.mxu0
    %270 = vdwg.mxu0
    %271 = vmatpush.bf16.msra.mxu0 %v215
    %272 = vmatpush.bf16.msra.mxu0 %v214
    %273 = vmatpush.bf16.msra.mxu0 %v213
    %274 = vmatpush.bf16.msra.mxu0 %v212
    %275 = vmatpush.bf16.msra.mxu0 %v211
    %276 = vmatpush.bf16.msra.mxu0 %v210
    %277 = vmatpush.bf16.msra.mxu0 %v209
    %278 = vmatpush.bf16.msra.mxu0 %v208
    %279 = vmatmul.bf16.gmra.mxu0 %v87
    %v280 = vpop.f32.mrf.mxu0
    %v281 = vadd.f32 %v268, %v280
    %v282 = vpop.f32.mrf.mxu0
    %283 = vdwg.mxu0
    %284 = vmatpush.bf16.msra.mxu0 0
    %285 = vmatpush.bf16.msra.mxu0 0
    %286 = vmatpush.bf16.msra.mxu0 0
    %287 = vmatpush.bf16.msra.mxu0 0
    %288 = vmatpush.bf16.msra.mxu0 0
    %289 = vmatpush.bf16.msra.mxu0 0
    %290 = vmatpush.bf16.msra.mxu0 0
    %291 = vmatpush.bf16.msra.mxu0 %v216
    %292 = vmatmul.bf16.gmra.mxu0 %v243
    %v293 = vpop.f32.mrf.mxu0
    %v294 = vadd.f32 %v281, %v293
    %v295 = vpop.f32.mrf.mxu0
    %296 = vdwg.mxu0
    %v297 = vtanh.pop %v294
    %v298 = vpack.c.bf16 %v297, %v297
    %v299 = vld [vmem:[%s3] sm:$0xf]
    %v300 = vld [vmem:[%s3 + $0x4] sm:$0xf]
    %v301 = vld [vmem:[%s3 + $0x8] sm:$0xf]
    %v302 = vld [vmem:[%s3 + $0xc] sm:$0xf]
    %v303 = vld [vmem:[%s3 + $0x10] sm:$0xf]
    %v304 = vld [vmem:[%s3 + $0x14] sm:$0xf]
    %v305 = vld [vmem:[%s3 + $0x18] sm:$0xf]
    %v306 = vld [vmem:[%s3 + $0x1c] sm:$0xf]
    %v307 = vld [vmem:[%s3 + $0x20] sm:$0xf]
    %v308 = vld [vmem:[%s3 + $0x24] sm:$0xf]
    %v309 = vld [vmem:[%s3 + $0x28] sm:$0xf]
    %v310 = vld [vmem:[%s3 + $0x2c] sm:$0xf]
    %v311 = vld [vmem:[%s3 + $0x30] sm:$0xf]
    %v312 = vld [vmem:[%s3 + $0x34] sm:$0xf]
    %v313 = vld [vmem:[%s3 + $0x38] sm:$0xf]
    %v314 = vld [vmem:[%s4] sm:$0x1]
    %v316 = vperm.slane %v314, 0
    %v333 = vunpack.c.l.b16 %v299
    %v334 = vunpack.c.l.b16 %v300
    %v335 = vunpack.c.l.b16 %v301
    %v336 = vunpack.c.l.b16 %v302
    %v337 = vunpack.c.l.b16 %v303
    %v338 = vunpack.c.l.b16 %v304
    %v339 = vunpack.c.l.b16 %v305
    %v340 = vunpack.c.l.b16 %v306
    %v341 = vunpack.c.l.b16 %v307
    %v342 = vunpack.c.l.b16 %v308
    %v343 = vunpack.c.l.b16 %v309
    %v344 = vunpack.c.l.b16 %v310
    %v345 = vunpack.c.l.b16 %v311
    %v346 = vunpack.c.l.b16 %v312
    %v347 = vunpack.c.l.b16 %v313
    %v348 = vpack.c.b16 %v334, %v333
    %v349 = vpack.c.b16 %v336, %v335
    %v350 = vpack.c.b16 %v338, %v337
    %v351 = vpack.c.b16 %v340, %v339
    %v352 = vpack.c.b16 %v342, %v341
    %v353 = vpack.c.b16 %v344, %v343
    %v354 = vpack.c.b16 %v346, %v345
    %v355 = vpack.c.b16 %v347, %v347
    %vm363 = vcmask 982016
    %v365 = vsel %vm363, %v298, 0
    %vm367 = vcmask 1043456
    %v369 = vsel %vm367, %v355, 0
    %371 = vmatpush.bf16.msra.mxu0 %v369
    %372 = vmatpush.bf16.msra.mxu0 %v354
    %373 = vmatpush.bf16.msra.mxu0 %v353
    %374 = vmatpush.bf16.msra.mxu0 %v352
    %375 = vmatpush.bf16.msra.mxu0 %v351
    %376 = vmatpush.bf16.msra.mxu0 %v350
    %377 = vmatpush.bf16.msra.mxu0 %v349
    %378 = vmatpush.bf16.msra.mxu0 %v348
    %379 = vmatmul.bf16.gmra.mxu0 %v365
    %v380 = vpop.f32.mrf.mxu0
    %v381 = vadd.f32 %v316, %v380
    %v382 = vpop.f32.mrf.mxu0
    %383 = vdwg.mxu0
    %v384 = vtanh.pop %v381
    %v385 = vpack.c.bf16 %v384, %v384
    %v386 = vld [vmem:[%s5] sm:$0xf]
    %v387 = vld [vmem:[%s5 + $0x4] sm:$0xf]
    %v388 = vld [vmem:[%s5 + $0x8] sm:$0xf]
    %v389 = vld [vmem:[%s5 + $0xc] sm:$0xf]
    %v390 = vld [vmem:[%s5 + $0x10] sm:$0xf]
    %v391 = vld [vmem:[%s5 + $0x14] sm:$0xf]
    %v392 = vld [vmem:[%s5 + $0x18] sm:$0xf]
    %v393 = vld [vmem:[%s5 + $0x1c] sm:$0xf]
    %v394 = vld [vmem:[%s5 + $0x20] sm:$0xf]
    %v395 = vld [vmem:[%s5 + $0x24] sm:$0xf]
    %v396 = vld [vmem:[%s5 + $0x28] sm:$0x3]
    %v397 = vld [vmem:[%s6] sm:$0x1]
    %v399 = vperm.slane %v397, 0
    %v412 = vunpack.c.l.b16 %v386
    %v413 = vunpack.c.l.b16 %v387
    %v414 = vunpack.c.l.b16 %v388
    %v415 = vunpack.c.l.b16 %v389
    %v416 = vunpack.c.l.b16 %v390
    %v417 = vunpack.c.l.b16 %v391
    %v418 = vunpack.c.l.b16 %v392
    %v419 = vunpack.c.l.b16 %v393
    %v420 = vunpack.c.l.b16 %v394
    %v421 = vunpack.c.l.b16 %v395
    %v422 = vunpack.c.l.b16 %v396
    %v423 = vpack.c.b16 %v413, %v412
    %v424 = vpack.c.b16 %v415, %v414
    %v425 = vpack.c.b16 %v417, %v416
    %v426 = vpack.c.b16 %v419, %v418
    %v427 = vpack.c.b16 %v421, %v420
    %v428 = vpack.c.b16 %v422, %v422
    %vm434 = vcmask 687104
    %v436 = vsel %vm434, %v385, 0
    %vm438 = vcmask 1041408
    %v440 = vsel %vm438, %v428, 0
    %442 = vmatpush.bf16.msra.mxu0 0
    %443 = vmatpush.bf16.msra.mxu0 0
    %444 = vmatpush.bf16.msra.mxu0 %v440
    %445 = vmatpush.bf16.msra.mxu0 %v427
    %446 = vmatpush.bf16.msra.mxu0 %v426
    %447 = vmatpush.bf16.msra.mxu0 %v425
    %448 = vmatpush.bf16.msra.mxu0 %v424
    %449 = vmatpush.bf16.msra.mxu0 %v423
    %450 = vmatmul.bf16.gmra.mxu0 %v436
    %v451 = vpop.f32.mrf.mxu0
    %v452 = vadd.f32 %v399, %v451
    %v453 = vpop.f32.mrf.mxu0
    %454 = vdwg.mxu0
    %vm455 = vcmask 74752
    %v456 = vsel %vm455, %v452, -inf
    %457 = vmax.xlane.f32.xlu0 %v456
    %v458 = vpop.xlane.xlu0 %457
    %v459 = vsub.f32 %v452, %v458
    %v460 = vmul.f32 %v459, 1.442695
    %v461 = vpow.pop %v460
    %v462 = vsel %vm455, %v461, 0.0
    %463 = vadd.xlane.f32.xlu0 %v462
    %v464 = vpop.xlane.xlu0 %463
    %v465 = vlog2.pop %v464
    %v466 = vmul.f32 %v465, 0.6931472
    %v467 = vsub.f32 %v459, %v466
    %468 = vst.msk [vmem:[#allocation2] sm:$0x3] %vm455, %v467
    // Predicated region
    $region30: #{lenet5_forward.5} parent=1 // pred_check
      _
    $region31: #{lenet5_forward.5} parent=1 // pred_check_branch
      %470 = sbr.rel (0) target = $region33
    $region32: #{lenet5_forward.5} parent=1 // pred_region
      %472 = vsyncadd [#allocation3], 0
      %s474 = sshll.u32 [#allocation2], 4
      %s475 = int_to_ptr.vmem [resolvable:$true] %s474
      %s476 = sshll.u32 %s7, 4
      %s477 = int_to_ptr.hbm [resolvable:$true] %s476
      %479 = dma.vmem_to_hbm [thread:$0]  %s475, 32, %s477, [#allocation3]
    $region33: #{lenet5_forward.5} parent=1 // pred_fallthru
      _
    // Predicated region
    $region34: #{lenet5_forward.5} parent=1 // pred_check
      _
    $region35: #{lenet5_forward.5} parent=1 // pred_check_branch
      %481 = sbr.rel (0) target = $region37
    $region36: #{lenet5_forward.5} parent=1 // pred_region
      %483 = dma.done [#allocation3], 32
    $region37: #{lenet5_forward.5} parent=1 // pred_fallthru
      _
    %484 = vsyncpa [#allocation3], 1

</llo_original>
